<compile_context>
chip_gen: v5e
topology: v5e:2x2
jax: 0.10.0
libtpu: 0.0.40
codegen_flags: <defaults>
</compile_context>

<pallas_src>
import functools

import jax
import jax.numpy as jnp
from jax import lax
from jax.experimental import pallas as pl
from jax.experimental.pallas import tpu as pltpu

_LANES = 128
_BIG = float(jnp.finfo(jnp.float32).max)   # finite sentinel for masked elements


def _round_up(v: int, m: int) -> int:
    return ((v + m - 1) // m) * m


def _entropic_kernel(x_ref, m_ref, s_ref, *, a: float, n: int,
                     block_rows: int, tiles_per_core: int):
    c = pl.program_id(0)            # core (parallel) index
    j = pl.program_id(1)            # sequential tile index within a core
    b = c * tiles_per_core + j      # logical block index into the (rows, 128) layout

    @pl.when(j == 0)
    def _():
        m_ref[...] = jnp.full(m_ref.shape, _BIG, jnp.float32)
        s_ref[...] = jnp.zeros(s_ref.shape, jnp.float32)

    def accumulate(x, e_mask):
        # x: (block_rows, 128) f32.  Everything here is elementwise VPU/EUP
        # work on (8, 128) slots -- no cross-lane reduce, no scalar round-trip.
        xr = x.reshape(block_rows // 8, 8, _LANES)
        tile_min = jnp.min(xr, axis=0)                    # per-slot min (VPU)
        m_old = m_ref[0]
        m_new = jnp.minimum(m_old, tile_min)
        e = jnp.exp(-a * (xr - m_new[None]))              # exponent <= 0, EUP
        if e_mask is not None:
            e = jnp.where(e_mask, e, 0.0)                 # zero masked contributions
        part = jnp.sum(e, axis=0)                         # (8, 128) partial sum
        scale = jnp.exp(-a * (m_old - m_new))             # per-slot rescale (<= 1)
        s_ref[0] = s_ref[0] * scale + part
        m_ref[0] = m_new

    block_elems = block_rows * _LANES
    fully_valid = (b + 1) * block_elems <= n

    @pl.when(fully_valid)
    def _():
        # Hot path: no masking work at all.
        accumulate(x_ref[...].astype(jnp.float32), None)

    @pl.when(jnp.logical_not(fully_valid))
    def _():
        # Ragged / redundant final block: mask by flat element index.
        x = x_ref[...].astype(jnp.float32)
        row = lax.broadcasted_iota(jnp.int32, (block_rows, _LANES), 0)
        lane = lax.broadcasted_iota(jnp.int32, (block_rows, _LANES), 1)
        flat = (b * block_rows + row) * _LANES + lane
        valid = flat < n
        x = jnp.where(valid, x, _BIG)                     # never lowers the min
        accumulate(x, valid.reshape(block_rows // 8, 8, _LANES))


def entropic_risk_measure(input_T: jax.Array, a: float = 1.0,
                          block_elems: int = 512 * 1024) -> jax.Array:
    """Pallas-TPU implementation of EntropicRiskMeasure.forward."""
    if not a > 0:
        raise ValueError("Risk aversion coefficient should be positive.")
    x = jnp.ravel(input_T)
    if not jnp.issubdtype(x.dtype, jnp.floating):
        x = x.astype(jnp.float32)
    n = int(x.shape[0])
    if n == 0:
        raise ValueError("Input must be non-empty.")

    # Sublane granularity for the native dtype (f32: 8, bf16/f16: 16, 1B: 32).
    sub = max(8, 32 // x.dtype.itemsize)
    pad_unit = sub * _LANES

    # Lane-dense (rows, 128) layout.  Aligned inputs are a zero-copy reshape;
    # only a ragged tail (< pad_unit elements) gets padded, and the pad region
    # plus any partial final block are masked inside the kernel.
    n_padded = _round_up(n, pad_unit)
    if n_padded != n:
        # TODO(synk): this small pad still costs one XLA copy pass; it could be
        # avoided by handling the <pad_unit tail in the pure-JAX epilogue.
        x = jnp.pad(x, (0, n_padded - n))
    rows = n_padded // _LANES
    x2d = x.reshape(rows, _LANES)

    target_rows = max(sub, (block_elems // _LANES) // sub * sub)   # ~2 MiB f32 blocks
    block_rows = min(target_rows, rows)
    total_tiles = pl.cdiv(rows, block_rows)
    num_cores = 2 if total_tiles >= 2 else 1      # v7x: shard across both TensorCores
    tiles_per_core = pl.cdiv(total_tiles, num_cores)

    kernel = functools.partial(
        _entropic_kernel, a=float(a), n=n,
        block_rows=block_rows, tiles_per_core=tiles_per_core)

    def x_map(c, j):
        # Clamp so a core's trailing (fully masked, redundant) step never
        # indexes past the array; its data is masked out by the flat-index test.
        return (jnp.minimum(c * tiles_per_core + j, total_tiles - 1), 0)

    m_parts, s_parts = pl.pallas_call(
        kernel,
        out_shape=(
            jax.ShapeDtypeStruct((num_cores, 8, _LANES), jnp.float32),
            jax.ShapeDtypeStruct((num_cores, 8, _LANES), jnp.float32),
        ),
        grid_spec=pltpu.PrefetchScalarGridSpec(
            num_scalar_prefetch=0,
            grid=(num_cores, tiles_per_core),
            in_specs=[pl.BlockSpec((block_rows, _LANES), x_map)],
            out_specs=(
                pl.BlockSpec((1, 8, _LANES), lambda c, j: (c, 0, 0)),
                pl.BlockSpec((1, 8, _LANES), lambda c, j: (c, 0, 0)),
            ),
        ),
        compiler_params=pltpu.CompilerParams(
            dimension_semantics=("parallel", "arbitrary"),
        ),
    )(x2d)

    # Tiny JAX epilogue over num_cores*8*128 partials: global min, rescale,
    # cross-lane sum, log.  Slots that only ever saw padding have m = _BIG and
    # s = 0, so they contribute 0 * exp(-huge) = 0.
    gmin = jnp.min(m_parts)
    total = jnp.sum(s_parts * jnp.exp(-a * (m_parts - gmin)))
    return jnp.log(total / n) / a - gmin


def entropic_risk_measure_ref(input_T: jax.Array, a: float = 1.0) -> jax.Array:
    """Pure-JAX reference matching the PyTorch forward exactly."""
    x = jnp.ravel(input_T).astype(jnp.float32)
    m = jnp.min(x)
    return jnp.log(jnp.mean(jnp.exp(-a * (x - m)))) / a - m


if __name__ == "__main__":
    key = jax.random.PRNGKey(0)
    k1, k2, k3 = jax.random.split(key, 3)

    # n_sample = 1024 terminal-wealth samples: aligned, single block, 1 core.
    x1 = jax.random.normal(k1, (1024,), dtype=jnp.float32) * 0.5 + 0.1
    r1 = jax.block_until_ready(entropic_risk_measure(x1, a=1.0))
    r1_ref = entropic_risk_measure_ref(x1, a=1.0)
    assert jnp.allclose(r1, r1_ref, rtol=1e-5, atol=1e-5), (r1, r1_ref)

    # Ragged n with tiny blocks: 4 tiles split over the 2-core grid, online
    # per-slot rescale path, and in-kernel tail masking of the last block.
    x2 = jax.random.normal(k2, (4000,), dtype=jnp.float32) * 2.0 - 0.3
    r2 = jax.block_until_ready(entropic_risk_measure(x2, a=0.7, block_elems=1024))
    r2_ref = entropic_risk_measure_ref(x2, a=0.7)
    assert jnp.allclose(r2, r2_ref, rtol=1e-5, atol=1e-5), (r2, r2_ref)

    # bf16 input streamed natively (2 B/elem HBM traffic), cast to f32 in-kernel.
    x3 = (jax.random.normal(k3, (2048,), dtype=jnp.float32) * 0.3 + 0.05).astype(jnp.bfloat16)
    r3 = jax.block_until_ready(entropic_risk_measure(x3, a=1.5))
    r3_ref = entropic_risk_measure_ref(x3, a=1.5)
    assert jnp.allclose(r3, r3_ref, rtol=1e-4, atol=1e-4), (r3, r3_ref)

    print("KERNEL_OK")
</pallas_src>

<mosaic_0001>
module attributes {stable_mosaic.version = 11 : i64} {
  func.func @_entropic_kernel(%arg0: i32, %arg1: i32, %arg2: memref<8x128xf32, #tpu.memory_space<vmem>>, %arg3: memref<1x8x128xf32, #tpu.memory_space<vmem>>, %arg4: memref<1x8x128xf32, #tpu.memory_space<vmem>>) attributes {dimension_semantics = [#tpu.dimension_semantics<parallel>, #tpu.dimension_semantics<arbitrary>], iteration_bounds = array<i64: 1, 1>, scalar_prefetch = 0 : i64, scratch_operands = 0 : i64, tpu.core_type = #tpu.core_type<tc>, window_params = [{transform_indices = @transform_0, window_bounds = array<i64: 8, 128>}, {transform_indices = @transform_1, window_bounds = array<i64: 1, 8, 128>}, {transform_indices = @transform_2, window_bounds = array<i64: 1, 8, 128>}]} {
    %c1_i32 = arith.constant 1 : i32
    %0 = arith.muli %arg0, %c1_i32 : i32
    %1 = arith.addi %0, %arg1 : i32
    %c0_i32 = arith.constant 0 : i32
    %2 = arith.cmpi eq, %arg1, %c0_i32 : i32
    %3 = arith.extui %2 : i1 to i32
    %c0_i32_0 = arith.constant 0 : i32
    %4 = arith.cmpi ne, %3, %c0_i32_0 : i32
    scf.if %4 {
      %cst = arith.constant 3.40282347E+38 : f32
      %13 = vector.broadcast %cst : f32 to vector<1x8x128xf32>
      %c0 = arith.constant 0 : index
      %c0_5 = arith.constant 0 : index
      %c0_6 = arith.constant 0 : index
      %14 = vector.load %arg3[%c0, %c0_5, %c0_6] : memref<1x8x128xf32, #tpu.memory_space<vmem>>, vector<1x8x128xf32>
      tpu.vector_store %arg3[%c0, %c0_5, %c0_6], %13 {strides = array<i32>} : memref<1x8x128xf32, #tpu.memory_space<vmem>>, vector<1x8x128xf32>,
      %cst_7 = arith.constant 0.000000e+00 : f32
      %15 = vector.broadcast %cst_7 : f32 to vector<1x8x128xf32>
      %c0_8 = arith.constant 0 : index
      %c0_9 = arith.constant 0 : index
      %c0_10 = arith.constant 0 : index
      %16 = vector.load %arg4[%c0_8, %c0_9, %c0_10] : memref<1x8x128xf32, #tpu.memory_space<vmem>>, vector<1x8x128xf32>
      tpu.vector_store %arg4[%c0_8, %c0_9, %c0_10], %15 {strides = array<i32>} : memref<1x8x128xf32, #tpu.memory_space<vmem>>, vector<1x8x128xf32>,
    } else {
    }
    %c1_i32_1 = arith.constant 1 : i32
    %5 = arith.addi %1, %c1_i32_1 : i32
    %c1024_i32 = arith.constant 1024 : i32
    %6 = arith.muli %5, %c1024_i32 : i32
    %c1024_i32_2 = arith.constant 1024 : i32
    %7 = arith.cmpi sle, %6, %c1024_i32_2 : i32
    %8 = arith.extui %7 : i1 to i32
    %c0_i32_3 = arith.constant 0 : i32
    %9 = arith.cmpi ne, %8, %c0_i32_3 : i32
    scf.if %9 {
      %c0 = arith.constant 0 : index
      %c0_5 = arith.constant 0 : index
      %13 = vector.load %arg2[%c0, %c0_5] : memref<8x128xf32, #tpu.memory_space<vmem>>, vector<8x128xf32>
      %14 = vector.shape_cast %13 : vector<8x128xf32> to vector<1x8x128xf32>
      %cst = arith.constant dense<0x7F800000> : vector<8x128xf32>
      %15 = vector.multi_reduction <minimumf>, %14, %cst [0] : vector<1x8x128xf32> to vector<8x128xf32>
      %c0_6 = arith.constant 0 : index
      %c0_7 = arith.constant 0 : index
      %c0_8 = arith.constant 0 : index
      %16 = vector.load %arg3[%c0_6, %c0_7, %c0_8] : memref<1x8x128xf32, #tpu.memory_space<vmem>>, vector<1x8x128xf32>
      %17 = vector.shape_cast %16 : vector<1x8x128xf32> to vector<8x128xf32>
      %18 = arith.minimumf %17, %15 : vector<8x128xf32>
      %19 = vector.shape_cast %18 : vector<8x128xf32> to vector<1x8x128xf32>
      %20 = arith.subf %14, %19 : vector<1x8x128xf32>
      %cst_9 = arith.constant -1.000000e+00 : f32
      %21 = vector.broadcast %cst_9 : f32 to vector<1x8x128xf32>
      %22 = arith.mulf %21, %20 : vector<1x8x128xf32>
      %23 = math.exp %22 : vector<1x8x128xf32>
      %cst_10 = arith.constant dense<0.000000e+00> : vector<8x128xf32>
      %24 = vector.multi_reduction <add>, %23, %cst_10 [0] : vector<1x8x128xf32> to vector<8x128xf32>
      %25 = arith.subf %17, %18 : vector<8x128xf32>
      %cst_11 = arith.constant -1.000000e+00 : f32
      %26 = vector.broadcast %cst_11 : f32 to vector<8x128xf32>
      %27 = arith.mulf %26, %25 : vector<8x128xf32>
      %28 = math.exp %27 : vector<8x128xf32>
      %c0_12 = arith.constant 0 : index
      %c0_13 = arith.constant 0 : index
      %c0_14 = arith.constant 0 : index
      %29 = vector.load %arg4[%c0_12, %c0_13, %c0_14] : memref<1x8x128xf32, #tpu.memory_space<vmem>>, vector<1x8x128xf32>
      %30 = vector.shape_cast %29 : vector<1x8x128xf32> to vector<8x128xf32>
      %31 = arith.mulf %30, %28 : vector<8x128xf32>
      %32 = arith.addf %31, %24 : vector<8x128xf32>
      %c0_15 = arith.constant 0 : index
      %c0_16 = arith.constant 0 : index
      %c0_17 = arith.constant 0 : index
      %33 = vector.load %arg4[%c0_15, %c0_16, %c0_17] : memref<1x8x128xf32, #tpu.memory_space<vmem>>, vector<1x8x128xf32>
      %34 = vector.shape_cast %33 : vector<1x8x128xf32> to vector<8x128xf32>
      %35 = vector.shape_cast %32 : vector<8x128xf32> to vector<1x8x128xf32>
      tpu.vector_store %arg4[%c0_15, %c0_16, %c0_17], %35 {strides = array<i32>} : memref<1x8x128xf32, #tpu.memory_space<vmem>>, vector<1x8x128xf32>,
      %c0_18 = arith.constant 0 : index
      %c0_19 = arith.constant 0 : index
      %c0_20 = arith.constant 0 : index
      %36 = vector.load %arg3[%c0_18, %c0_19, %c0_20] : memref<1x8x128xf32, #tpu.memory_space<vmem>>, vector<1x8x128xf32>
      %37 = vector.shape_cast %36 : vector<1x8x128xf32> to vector<8x128xf32>
      %38 = vector.shape_cast %18 : vector<8x128xf32> to vector<1x8x128xf32>
      tpu.vector_store %arg3[%c0_18, %c0_19, %c0_20], %38 {strides = array<i32>} : memref<1x8x128xf32, #tpu.memory_space<vmem>>, vector<1x8x128xf32>,
    } else {
    }
    %true = arith.constant true
    %10 = arith.xori %7, %true : i1
    %11 = arith.extui %10 : i1 to i32
    %c0_i32_4 = arith.constant 0 : i32
    %12 = arith.cmpi ne, %11, %c0_i32_4 : i32
    scf.if %12 {
      %c0 = arith.constant 0 : index
      %c0_5 = arith.constant 0 : index
      %13 = vector.load %arg2[%c0, %c0_5] : memref<8x128xf32, #tpu.memory_space<vmem>>, vector<8x128xf32>
      %14 = tpu.iota {dimensions = array<i32: 0>} : vector<8x128xi32>
      %15 = tpu.iota {dimensions = array<i32: 1>} : vector<8x128xi32>
      %c8_i32 = arith.constant 8 : i32
      %16 = arith.muli %1, %c8_i32 : i32
      %17 = vector.broadcast %16 : i32 to vector<8x128xi32>
      %18 = arith.addi %17, %14 : vector<8x128xi32>
      %c128_i32 = arith.constant 128 : i32
      %19 = vector.broadcast %c128_i32 : i32 to vector<8x128xi32>
      %20 = arith.muli %18, %19 : vector<8x128xi32>
      %21 = arith.addi %20, %15 : vector<8x128xi32>
      %c1024_i32_6 = arith.constant 1024 : i32
      %22 = vector.broadcast %c1024_i32_6 : i32 to vector<8x128xi32>
      %23 = arith.cmpi slt, %21, %22 : vector<8x128xi32>
      %cst = arith.constant 3.40282347E+38 : f32
      %24 = vector.broadcast %cst : f32 to vector<8x128xf32>
      %25 = arith.select %23, %13, %24 : vector<8x128xi1>, vector<8x128xf32>
      %26 = vector.shape_cast %23 : vector<8x128xi1> to vector<1x8x128xi1>
      %27 = vector.shape_cast %25 : vector<8x128xf32> to vector<1x8x128xf32>
      %cst_7 = arith.constant dense<0x7F800000> : vector<8x128xf32>
      %28 = vector.multi_reduction <minimumf>, %27, %cst_7 [0] : vector<1x8x128xf32> to vector<8x128xf32>
      %c0_8 = arith.constant 0 : index
      %c0_9 = arith.constant 0 : index
      %c0_10 = arith.constant 0 : index
      %29 = vector.load %arg3[%c0_8, %c0_9, %c0_10] : memref<1x8x128xf32, #tpu.memory_space<vmem>>, vector<1x8x128xf32>
      %30 = vector.shape_cast %29 : vector<1x8x128xf32> to vector<8x128xf32>
      %31 = arith.minimumf %30, %28 : vector<8x128xf32>
      %32 = vector.shape_cast %31 : vector<8x128xf32> to vector<1x8x128xf32>
      %33 = arith.subf %27, %32 : vector<1x8x128xf32>
      %cst_11 = arith.constant -1.000000e+00 : f32
      %34 = vector.broadcast %cst_11 : f32 to vector<1x8x128xf32>
      %35 = arith.mulf %34, %33 : vector<1x8x128xf32>
      %36 = math.exp %35 : vector<1x8x128xf32>
      %cst_12 = arith.constant 0.000000e+00 : f32
      %37 = vector.broadcast %cst_12 : f32 to vector<1x8x128xf32>
      %38 = arith.select %26, %36, %37 : vector<1x8x128xi1>, vector<1x8x128xf32>
      %cst_13 = arith.constant dense<0.000000e+00> : vector<8x128xf32>
      %39 = vector.multi_reduction <add>, %38, %cst_13 [0] : vector<1x8x128xf32> to vector<8x128xf32>
      %40 = arith.subf %30, %31 : vector<8x128xf32>
      %cst_14 = arith.constant -1.000000e+00 : f32
      %41 = vector.broadcast %cst_14 : f32 to vector<8x128xf32>
      %42 = arith.mulf %41, %40 : vector<8x128xf32>
      %43 = math.exp %42 : vector<8x128xf32>
      %c0_15 = arith.constant 0 : index
      %c0_16 = arith.constant 0 : index
      %c0_17 = arith.constant 0 : index
      %44 = vector.load %arg4[%c0_15, %c0_16, %c0_17] : memref<1x8x128xf32, #tpu.memory_space<vmem>>, vector<1x8x128xf32>
      %45 = vector.shape_cast %44 : vector<1x8x128xf32> to vector<8x128xf32>
      %46 = arith.mulf %45, %43 : vector<8x128xf32>
      %47 = arith.addf %46, %39 : vector<8x128xf32>
      %c0_18 = arith.constant 0 : index
      %c0_19 = arith.constant 0 : index
      %c0_20 = arith.constant 0 : index
      %48 = vector.load %arg4[%c0_18, %c0_19, %c0_20] : memref<1x8x128xf32, #tpu.memory_space<vmem>>, vector<1x8x128xf32>
      %49 = vector.shape_cast %48 : vector<1x8x128xf32> to vector<8x128xf32>
      %50 = vector.shape_cast %47 : vector<8x128xf32> to vector<1x8x128xf32>
      tpu.vector_store %arg4[%c0_18, %c0_19, %c0_20], %50 {strides = array<i32>} : memref<1x8x128xf32, #tpu.memory_space<vmem>>, vector<1x8x128xf32>,
      %c0_21 = arith.constant 0 : index
      %c0_22 = arith.constant 0 : index
      %c0_23 = arith.constant 0 : index
      %51 = vector.load %arg3[%c0_21, %c0_22, %c0_23] : memref<1x8x128xf32, #tpu.memory_space<vmem>>, vector<1x8x128xf32>
      %52 = vector.shape_cast %51 : vector<1x8x128xf32> to vector<8x128xf32>
      %53 = vector.shape_cast %31 : vector<8x128xf32> to vector<1x8x128xf32>
      tpu.vector_store %arg3[%c0_21, %c0_22, %c0_23], %53 {strides = array<i32>} : memref<1x8x128xf32, #tpu.memory_space<vmem>>, vector<1x8x128xf32>,
    } else {
    }
    return
  }
  func.func @transform_0(%arg0: i32, %arg1: i32) -> (i32, i32) {
    %c1_i32 = arith.constant 1 : i32
    %0 = arith.muli %arg0, %c1_i32 : i32
    %1 = arith.addi %0, %arg1 : i32
    %c0_i32 = arith.constant 0 : i32
    %2 = arith.minsi %1, %c0_i32 : i32
    %c0_i32_0 = arith.constant 0 : i32
    %c0_i32_1 = arith.constant 0 : i32
    return %2, %c0_i32_0 : i32, i32
  }
  func.func @transform_1(%arg0: i32, %arg1: i32) -> (i32, i32, i32) {
    %c0_i32 = arith.constant 0 : i32
    %c0_i32_0 = arith.constant 0 : i32
    %c0_i32_1 = arith.constant 0 : i32
    return %arg0, %c0_i32, %c0_i32_0 : i32, i32, i32
  }
  func.func @transform_2(%arg0: i32, %arg1: i32) -> (i32, i32, i32) {
    %c0_i32 = arith.constant 0 : i32
    %c0_i32_0 = arith.constant 0 : i32
    %c0_i32_1 = arith.constant 0 : i32
    return %arg0, %c0_i32, %c0_i32_0 : i32, i32, i32
  }
}

</mosaic_0001>

<llo_original>
// kernel: tpu_custom_call.1
$region0: #{tpu_custom_call.1}
  #allocation0 [shape = 'u32[]', space=smem, size = 0x4, offset = 0x4, fixed_abs, tag = 'smem constant byte address 0x4 - core index']
  #allocation1 [shape = 'u32[72,128]{1,0:T(1,128)}', space=vmem, size = 0x9000, scoped, tag = 'internal scratch']
  %s0 = inlined_call_operand.hbm [shape: f32[8,128], index: 0, kind: input, shape index: {}]
  %s1 = inlined_call_operand.hbm [shape: f32[1,8,128], index: 1, kind: output, shape index: {0}]
  %s2 = inlined_call_operand.hbm [shape: f32[1,8,128], index: 2, kind: output, shape index: {1}]
  %3 = xla_tuple %s1, %s2
  %s4 = sld [smem:[#allocation0]]
  $region38: #{tpu_custom_call.1} parent=0
    _
  %s6 = ssub.s32 1, %s4
  %s7 = scalar_select 0, %s6, %s4
  $region1: #{tpu_custom_call.1} parent=0
    #allocation2 [shape = 'u8[4096]{0}', space=vmem, size = 0x1000, scoped, tag = 'input window, operand 0, single buffered']
    #allocation3 [shape = 's32[1]{0}', space=sflag, size = 0x4, scoped, tag = 'scoped memory for tpu_custom_call.1']
    #allocation4 [shape = 's32[1]{0}', space=sflag, size = 0x4, scoped, tag = 'scoped memory for tpu_custom_call.1']
    #allocation5 [shape = 'u8[4096]{0}', space=vmem, size = 0x1000, scoped, tag = 'output window, operand 0, single buffered']
    #allocation6 [shape = 'u8[4096]{0}', space=vmem, size = 0x1000, scoped, tag = 'output window, operand 1, single buffered']
    #allocation7 [shape = 's32[1]{0}', space=sflag, size = 0x4, scoped, tag = 'scoped memory for tpu_custom_call.1']
    %8 = vsyncpa [#allocation3], 0
    %9 = vsyncpa [#allocation4], 0
    %10 = vsyncpa [#allocation7], 0
    // Predicated region
    $region2: #{tpu_custom_call.1} parent=1 // pred_check
      _
    $region3: #{tpu_custom_call.1} parent=1 // pred_check_branch
      %12 = sbr.rel (0) target = $region5
    $region4: #{tpu_custom_call.1} parent=1 // pred_region
      %s13 = sadd.s32 0, 0
      %p14 = scmp.lt.s32.totalorder %s13, 0
      %s15 = scalar_select %p14, %s13, 0
      %17 = vsyncadd [#allocation3], 0
      %s18 = smul.addr %s15, 8
      %s19 = scalar_lea.hbm %s0, %s18
      %s21 = sshll.u32 %s19, 4
      %s22 = int_to_ptr.hbm [resolvable:$true] %s21
      %s23 = sshll.u32 [#allocation2], 4
      %s24 = int_to_ptr.vmem [resolvable:$true] %s23
      %26 = dma.hbm_to_vmem [thread:$0]  %s22, 128, %s24, [#allocation3]
    $region5: #{tpu_custom_call.1} parent=1 // pred_fallthru
      _
    // Predicated region
    $region6: #{tpu_custom_call.1} parent=1 // pred_check
      _
    $region7: #{tpu_custom_call.1} parent=1 // pred_check_branch
      %28 = sbr.rel (0) target = $region9
    $region8: #{tpu_custom_call.1} parent=1 // pred_region
      %30 = dma.done [#allocation3], 128
    $region9: #{tpu_custom_call.1} parent=1 // pred_fallthru
      _
    %s31 = sadd.s32 0, 0
    %p32 = scmp.lt.s32.totalorder %s31, 0
    %s33 = scalar_select %p32, %s31, 0
    %s34 = sadd.s32 0, 0
    %p35 = scmp.eq.s32.totalorder 0, 0
    // Predicated region
    $region10: #{tpu_custom_call.1} parent=1 // pred_check
      %p36 = pneg %p35
    $region11: #{tpu_custom_call.1} parent=1 // pred_check_branch
      %38 = sbr.rel (%p36) target = $region13
    $region12: #{tpu_custom_call.1} parent=1 // pred_region
      %39 = vst [vmem:[#allocation5] sm:$0xff] 3.4028235e+38
      %40 = vst [vmem:[#allocation6] sm:$0xff] 0.0
    $region13: #{tpu_custom_call.1} parent=1 // pred_fallthru
      _
    %s41 = sadd.s32 %s34, 1
    %s42 = smul.u32 %s41, 1024
    %p43 = scmp.le.s32.totalorder %s42, 1024
    // Predicated region
    $region14: #{tpu_custom_call.1} parent=1 // pred_check
      %p44 = pneg %p43
    $region15: #{tpu_custom_call.1} parent=1 // pred_check_branch
      %46 = sbr.rel (%p44) target = $region17
    $region16: #{tpu_custom_call.1} parent=1 // pred_region
      %v47 = vld [vmem:[#allocation2] sm:$0xff]
      %v48 = vld [vmem:[#allocation5] sm:$0xff]
      %v49 = vmin.f32 %v48, %v47
      %v50 = vsub.f32 %v47, %v49
      %v51 = vmul.f32 %v50, -1.0
      %v52 = vmul.f32 %v51, 1.442695
      %v53 = vpow.pop %v52
      %v54 = vadd.f32 %v53, 0.0
      %v55 = vsub.f32 %v48, %v49
      %v56 = vmul.f32 %v55, -1.0
      %v57 = vmul.f32 %v56, 1.442695
      %v58 = vpow.pop %v57
      %v59 = vld [vmem:[#allocation6] sm:$0xff]
      %v60 = vmul.f32 %v59, %v58
      %v61 = vadd.f32 %v60, %v54
      %62 = vst [vmem:[#allocation6] sm:$0xff] %v61
      %63 = vst [vmem:[#allocation5] sm:$0xff] %v49
    $region17: #{tpu_custom_call.1} parent=1 // pred_fallthru
      _
    %p64 = scmp.gt.s32.totalorder %s42, 1024
    // Predicated region
    $region18: #{tpu_custom_call.1} parent=1 // pred_check
      %p65 = pneg %p64
    $region19: #{tpu_custom_call.1} parent=1 // pred_check_branch
      %67 = sbr.rel (%p65) target = $region21
    $region20: #{tpu_custom_call.1} parent=1 // pred_region
      %v68 = vld [vmem:[#allocation2] sm:$0xff]
      %v69 = vlaneseq
      %v70 = vshrl.u32 %v69, 7
      %v71 = vlaneseq
      %v72 = vand.u32 %v71, 127
      %s73 = smul.u32 %s34, 8
      %v74 = vstv %s73
      %v75 = vadd.s32 %v74, %v70
      %v76 = vmul.u32 %v75, 128
      %v77 = vadd.s32 %v76, %v72
      %vm78 = vcmp.lt.s32.totalorder %v77, 1024
      %v79 = vsel %vm78, %v68, 3.4028235e+38
      %v80 = vld [vmem:[#allocation5] sm:$0xff]
      %v81 = vmin.f32 %v80, %v79
      %v82 = vsub.f32 %v79, %v81
      %v83 = vmul.f32 %v82, -1.0
      %v84 = vmul.f32 %v83, 1.442695
      %v85 = vpow.pop %v84
      %v86 = vsel %vm78, %v85, 0.0
      %v87 = vadd.f32 %v86, 0.0
      %v88 = vsub.f32 %v80, %v81
      %v89 = vmul.f32 %v88, -1.0
      %v90 = vmul.f32 %v89, 1.442695
      %v91 = vpow.pop %v90
      %v92 = vld [vmem:[#allocation6] sm:$0xff]
      %v93 = vmul.f32 %v92, %v91
      %v94 = vadd.f32 %v93, %v87
      %95 = vst [vmem:[#allocation6] sm:$0xff] %v94
      %96 = vst [vmem:[#allocation5] sm:$0xff] %v81
    $region21: #{tpu_custom_call.1} parent=1 // pred_fallthru
      _
    // Predicated region
    $region22: #{tpu_custom_call.1} parent=1 // pred_check
      _
    $region23: #{tpu_custom_call.1} parent=1 // pred_check_branch
      %98 = sbr.rel (0) target = $region25
    $region24: #{tpu_custom_call.1} parent=1 // pred_region
      %100 = vsyncadd [#allocation4], 0
      %s102 = sshll.u32 [#allocation5], 4
      %s103 = int_to_ptr.vmem [resolvable:$true] %s102
      %s104 = sshll.u32 %s1, 4
      %s105 = int_to_ptr.hbm [resolvable:$true] %s104
      %107 = dma.vmem_to_hbm [thread:$0]  %s103, 128, %s105, [#allocation4]
    $region25: #{tpu_custom_call.1} parent=1 // pred_fallthru
      _
    // Predicated region
    $region26: #{tpu_custom_call.1} parent=1 // pred_check
      _
    $region27: #{tpu_custom_call.1} parent=1 // pred_check_branch
      %109 = sbr.rel (0) target = $region29
    $region28: #{tpu_custom_call.1} parent=1 // pred_region
      %111 = vsyncadd [#allocation7], 0
      %s113 = sshll.u32 [#allocation6], 4
      %s114 = int_to_ptr.vmem [resolvable:$true] %s113
      %s115 = sshll.u32 %s2, 4
      %s116 = int_to_ptr.hbm [resolvable:$true] %s115
      %118 = dma.vmem_to_hbm [thread:$0]  %s114, 128, %s116, [#allocation7]
    $region29: #{tpu_custom_call.1} parent=1 // pred_fallthru
      _
    // Predicated region
    $region30: #{tpu_custom_call.1} parent=1 // pred_check
      _
    $region31: #{tpu_custom_call.1} parent=1 // pred_check_branch
      %120 = sbr.rel (0) target = $region33
    $region32: #{tpu_custom_call.1} parent=1 // pred_region
      %122 = dma.done [#allocation4], 128
    $region33: #{tpu_custom_call.1} parent=1 // pred_fallthru
      _
    // Predicated region
    $region34: #{tpu_custom_call.1} parent=1 // pred_check
      _
    $region35: #{tpu_custom_call.1} parent=1 // pred_check_branch
      %124 = sbr.rel (0) target = $region37
    $region36: #{tpu_custom_call.1} parent=1 // pred_region
      %126 = dma.done [#allocation7], 128
    $region37: #{tpu_custom_call.1} parent=1 // pred_fallthru
      _
    %127 = vsyncpa [#allocation3], 1
    %128 = vsyncpa [#allocation4], 1
    %129 = vsyncpa [#allocation7], 1

</llo_original>
